<compile_context>
chip_gen: v5e
topology: v5e:2x2
jax: 0.10.0
libtpu: 0.0.40
codegen_flags: <defaults>
</compile_context>

<pallas_src>
import functools

import jax
import jax.numpy as jnp
import numpy as np
from jax.experimental import pallas as pl
from jax.experimental.pallas import tpu as pltpu


def basic_block_kernel(x_ref, b1_ref, b2_ref, t_ref, out_ref, *, H):
    # x_ref  : (Mb, W*Cin)        Mb = Nb*H rows of flattened NHWC input
    # b1_ref : (W*Cin,  3*W*Cout) banded conv1 weights * bn1 scale (kh-major)
    # b2_ref : (W*Cout, 3*W*Cout) banded conv2 weights * bn2 scale
    # t_ref  : (2, W*Cout)        folded BN biases (row 0: bn1, row 1: bn2)
    # out_ref: (Mb, W*Cout)
    M = out_ref.shape[0]
    Wc = out_ref.shape[1]                       # = W * Cout (lane-dense, 128)

    xr = jnp.maximum(x_ref[...], 0.0)           # relu(x), (M, W*Cin)
    # Row index *within its image*: masks must not cross batch boundaries when
    # several batch elements share the sublane axis.
    row = jax.lax.broadcasted_iota(jnp.int32, (M, Wc), 0) % H

    t = t_ref[...]                              # (2, Wc) f32
    t1 = t[0:1, :]
    t2 = t[1:2, :]

    def conv3x3_banded(inp, w_ref):
        # One matmul produces all three kh taps as lane-aligned column blocks.
        # Operands may be bf16 (wrapper choice); accumulate in f32 on the MXU.
        taps = jnp.dot(inp.astype(w_ref.dtype), w_ref[...],
                       preferred_element_type=jnp.float32)
        a0 = taps[:, 0 * Wc:1 * Wc]             # kh=0: out[h] uses in row h-1
        a1 = taps[:, 1 * Wc:2 * Wc]             # kh=1: out[h] uses in row h
        a2 = taps[:, 2 * Wc:3 * Wc]             # kh=2: out[h] uses in row h+1
        # Vertical zero-padding: roll along sublanes (XLU, ~free) and mask the
        # rows that would otherwise pick up the neighbouring image's rows.
        down = jnp.where(row >= 1, pltpu.roll(a0, shift=1, axis=0), 0.0)
        up = jnp.where(row <= H - 2, pltpu.roll(a2, shift=M - 1, axis=0), 0.0)
        return a1 + down + up

    # BN scale is pre-folded into b1/b2; only the bias remains here.
    h1 = jnp.maximum(conv3x3_banded(xr, b1_ref) + t1, 0.0)      # bn1 + relu
    h2 = conv3x3_banded(h1, b2_ref) + t2                        # bn2
    out_ref[...] = (h2 + xr).astype(out_ref.dtype)              # + residual


def _banded_weights(w_hwio, W_spatial, scale=None):
    """(3,3,Cin,Cout) HWIO -> (W*Cin, 3*W*Cout) banded matrix.

    Column block kh contains, for output column (w, co), the kw/ci taps laid
    out along the row axis at (w+kw-1)*Cin + ci; out-of-range w+kw-1 rows are
    simply absent, which implements the horizontal zero padding.  If `scale`
    (per-Cout BN scale) is given it is folded into the columns.
    """
    KH, KW, Cin, Cout = w_hwio.shape
    sel = np.zeros((KW, W_spatial, W_spatial), np.float32)
    for kw in range(KW):
        for w in range(W_spatial):
            wi = w + kw - 1
            if 0 <= wi < W_spatial:
                sel[kw, wi, w] = 1.0
    sel = jnp.asarray(sel)
    # (wi, ci, kh, w, co) -> (W*Cin, 3*W*Cout)
    b = jnp.einsum('kvw,hkio->vihwo', sel, w_hwio)
    b = b.reshape(W_spatial * Cin, KH * W_spatial * Cout)
    if scale is not None:
        b = b * jnp.tile(scale, KH * W_spatial)[None, :]
    return b


def prepare_basic_block_params(w1_oihw, w2_oihw, bn1, bn2, W_spatial,
                               eps=1e-5, matmul_dtype=jnp.float32):
    """One-time weight prep: banded conv weights with folded BN scale + biases.

    Run this once (outside the per-step path); its outputs are reused for
    every forward call.  Set matmul_dtype=jnp.bfloat16 on v6e/v7x at real
    channel counts to halve weight DMA/VMEM and speed up the MXU.
    """
    def fold(bn):
        gamma, beta, mean, var = bn
        scale = gamma / jnp.sqrt(var + eps)
        bias = beta - mean * scale
        return scale, jnp.tile(bias, W_spatial)          # (Cout,), (W*Cout,)

    s1, t1 = fold(bn1)
    s2, t2 = fold(bn2)

    w1_hwio = jnp.transpose(w1_oihw, (2, 3, 1, 0))       # OIHW -> HWIO
    w2_hwio = jnp.transpose(w2_oihw, (2, 3, 1, 0))
    b1 = _banded_weights(w1_hwio, W_spatial, s1).astype(matmul_dtype)
    b2 = _banded_weights(w2_hwio, W_spatial, s2).astype(matmul_dtype)
    t = jnp.stack([t1, t2]).astype(jnp.float32)          # (2, W*Cout)
    return b1, b2, t


def basic_block_apply_flat(x_flat, b1, b2, t, *, H):
    """x_flat: (N*H, W*Cin) lane-dense activations. Returns (N*H, W*Cout)."""
    total_rows, WCin = x_flat.shape
    WCout = t.shape[1]
    assert total_rows % H == 0
    N = total_rows // H

    # Batch several images per grid step so the matmul M dim approaches the
    # MXU height (<=256 rows); fewer grid steps = less fixed per-step overhead.
    nb = 1
    for cand in range(1, N + 1):
        if N % cand == 0 and cand * H <= 256 and (cand * H) % 8 == 0:
            nb = cand
    Mb = nb * H
    grid = (N // nb,)

    out_flat = pl.pallas_call(
        functools.partial(basic_block_kernel, H=H),
        out_shape=jax.ShapeDtypeStruct((total_rows, WCout), jnp.float32),
        grid_spec=pltpu.PrefetchScalarGridSpec(
            num_scalar_prefetch=0,
            grid=grid,
            in_specs=[
                pl.BlockSpec((Mb, WCin), lambda i: (i, 0)),
                # Constant-index weight/bias blocks: Pallas skips the re-DMA
                # when the block index is unchanged between grid steps.
                pl.BlockSpec(b1.shape, lambda i: (0, 0)),
                pl.BlockSpec(b2.shape, lambda i: (0, 0)),
                pl.BlockSpec(t.shape, lambda i: (0, 0)),
            ],
            out_specs=pl.BlockSpec((Mb, WCout), lambda i: (i, 0)),
        ),
        compiler_params=pltpu.CompilerParams(
            dimension_semantics=("parallel",)),   # batch-sharded over v7x TCs
    )(x_flat, b1, b2, t)
    return out_flat


def basic_block_forward(x_nchw, w1_oihw, w2_oihw, bn1, bn2, eps=1e-5):
    """Convenience NCHW wrapper. x_nchw: (N, Cin, H, W) f32 -> (N, Cout, H, W).

    When chaining blocks, call prepare_basic_block_params once per block and
    keep activations in the (N*H, W*C) layout between basic_block_apply_flat
    calls instead of transposing around every pallas_call.
    """
    N, Cin, H, W = x_nchw.shape
    Cout = w1_oihw.shape[0]
    assert Cin == Cout, "downsample=None requires inplanes == planes"

    b1, b2, t = prepare_basic_block_params(w1_oihw, w2_oihw, bn1, bn2, W,
                                           eps=eps, matmul_dtype=jnp.float32)

    # NCHW -> lane-dense flattened NHWC rows: (N*H, W*C) (=128 lanes here).
    x_flat = jnp.transpose(x_nchw, (0, 2, 3, 1)).reshape(N * H, W * Cin)
    out_flat = basic_block_apply_flat(x_flat, b1, b2, t, H=H)
    out_nhwc = out_flat.reshape(N, H, W, Cout)
    return jnp.transpose(out_nhwc, (0, 3, 1, 2))


def reference_forward(x, w1, w2, bn1, bn2, eps=1e-5):
    """Pure-JAX reference in NCHW, mirroring the PyTorch forward exactly."""
    x = jax.nn.relu(x)
    residual = x

    def conv(a, w):
        return jax.lax.conv_general_dilated(
            a, w, window_strides=(1, 1), padding=((1, 1), (1, 1)),
            dimension_numbers=('NCHW', 'OIHW', 'NCHW'))

    def bn(a, p):
        g, b, m, v = (t[None, :, None, None] for t in p)
        return (a - m) / jnp.sqrt(v + eps) * g + b

    out = jax.nn.relu(bn(conv(x, w1), bn1))
    out = bn(conv(out, w2), bn2)
    return out + residual


if __name__ == "__main__":
    N, C, H, W = 2, 8, 16, 16       # inplanes == planes == 8 (downsample=None)
    key = jax.random.PRNGKey(0)
    ks = jax.random.split(key, 12)

    x = jax.random.normal(ks[0], (N, C, H, W), jnp.float32)
    w1 = jax.random.normal(ks[1], (C, C, 3, 3), jnp.float32) * 0.1   # conv1 OIHW
    w2 = jax.random.normal(ks[2], (C, C, 3, 3), jnp.float32) * 0.1   # conv2 OIHW
    bn1 = (jax.random.uniform(ks[3], (C,), jnp.float32, 0.5, 1.5),   # gamma
           jax.random.normal(ks[4], (C,), jnp.float32) * 0.1,        # beta
           jax.random.normal(ks[5], (C,), jnp.float32) * 0.1,        # running_mean
           jax.random.uniform(ks[6], (C,), jnp.float32, 0.5, 1.5))   # running_var
    bn2 = (jax.random.uniform(ks[7], (C,), jnp.float32, 0.5, 1.5),
           jax.random.normal(ks[8], (C,), jnp.float32) * 0.1,
           jax.random.normal(ks[9], (C,), jnp.float32) * 0.1,
           jax.random.uniform(ks[10], (C,), jnp.float32, 0.5, 1.5))

    out = basic_block_forward(x, w1, w2, bn1, bn2)
    out = jax.block_until_ready(out)

    ref = jax.block_until_ready(reference_forward(x, w1, w2, bn1, bn2))
    np.testing.assert_allclose(np.asarray(out), np.asarray(ref),
                               rtol=1e-4, atol=1e-4)
    print("KERNEL_OK")
</pallas_src>

<mosaic_0001>
module attributes {stable_mosaic.version = 11 : i64} {
  func.func @basic_block_kernel(%arg0: i32, %arg1: memref<32x128xf32, #tpu.memory_space<vmem>>, %arg2: memref<128x384xf32, #tpu.memory_space<vmem>>, %arg3: memref<128x384xf32, #tpu.memory_space<vmem>>, %arg4: memref<2x128xf32, #tpu.memory_space<vmem>>, %arg5: memref<32x128xf32, #tpu.memory_space<vmem>>) attributes {dimension_semantics = [#tpu.dimension_semantics<parallel>], iteration_bounds = array<i64: 1>, scalar_prefetch = 0 : i64, scratch_operands = 0 : i64, tpu.core_type = #tpu.core_type<tc>, window_params = [{transform_indices = @transform_0, window_bounds = array<i64: 32, 128>}, {pipeline_mode = #tpu.pipeline_mode<synchronous>, transform_indices = @transform_1, window_bounds = array<i64: 128, 384>}, {pipeline_mode = #tpu.pipeline_mode<synchronous>, transform_indices = @transform_2, window_bounds = array<i64: 128, 384>}, {pipeline_mode = #tpu.pipeline_mode<synchronous>, transform_indices = @transform_3, window_bounds = array<i64: 2, 128>}, {transform_indices = @transform_4, window_bounds = array<i64: 32, 128>}]} {
    %c0 = arith.constant 0 : index
    %c0_0 = arith.constant 0 : index
    %0 = vector.load %arg1[%c0, %c0_0] : memref<32x128xf32, #tpu.memory_space<vmem>>, vector<32x128xf32>
    %cst = arith.constant 0.000000e+00 : f32
    %1 = vector.broadcast %cst : f32 to vector<32x128xf32>
    %2 = arith.maximumf %0, %1 : vector<32x128xf32>
    %3 = tpu.iota {dimensions = array<i32: 0>} : vector<32x128xi32>
    %c16_i32 = arith.constant 16 : i32
    %c0_i32 = arith.constant 0 : i32
    %4 = arith.cmpi eq, %c16_i32, %c0_i32 : i32
    %c1_i32 = arith.constant 1 : i32
    %5 = arith.select %4, %c1_i32, %c16_i32 : i32
    %6 = vector.broadcast %5 : i32 to vector<32x128xi32>
    %7 = arith.remsi %3, %6 : vector<32x128xi32>
    %c0_i32_1 = arith.constant 0 : i32
    %8 = vector.broadcast %c0_i32_1 : i32 to vector<32x128xi32>
    %9 = arith.cmpi ne, %7, %8 : vector<32x128xi32>
    %c0_i32_2 = arith.constant 0 : i32
    %10 = vector.broadcast %c0_i32_2 : i32 to vector<32x128xi32>
    %11 = arith.cmpi slt, %7, %10 : vector<32x128xi32>
    %c0_i32_3 = arith.constant 0 : i32
    %12 = arith.cmpi slt, %5, %c0_i32_3 : i32
    %13 = vector.broadcast %12 : i1 to vector<32x128xi1>
    %14 = vector.broadcast %13 : vector<32x128xi1> to vector<32x128xi1>
    %15 = arith.xori %11, %14 : vector<32x128xi1>
    %16 = arith.andi %15, %9 : vector<32x128xi1>
    %17 = vector.broadcast %5 : i32 to vector<32x128xi32>
    %18 = arith.addi %7, %17 : vector<32x128xi32>
    %19 = arith.select %16, %18, %7 : vector<32x128xi1>, vector<32x128xi32>
    %c0_4 = arith.constant 0 : index
    %c0_5 = arith.constant 0 : index
    %20 = vector.load %arg4[%c0_4, %c0_5] : memref<2x128xf32, #tpu.memory_space<vmem>>, vector<2x128xf32>
    %21 = vector.extract_strided_slice %20 {offsets = [0, 0], sizes = [1, 128], strides = [1, 1]} : vector<2x128xf32> to vector<1x128xf32>
    %22 = vector.extract_strided_slice %20 {offsets = [1, 0], sizes = [1, 128], strides = [1, 1]} : vector<2x128xf32> to vector<1x128xf32>
    %c0_6 = arith.constant 0 : index
    %c0_7 = arith.constant 0 : index
    %23 = vector.load %arg2[%c0_6, %c0_7] : memref<128x384xf32, #tpu.memory_space<vmem>>, vector<128x384xf32>
    %cst_8 = arith.constant dense<0.000000e+00> : vector<32x384xf32>
    %24 = tpu.matmul %2, %23, %cst_8 {dimension_numbers = #tpu.dot_dimension_numbers<[1], [0], [0], [1], [0, 0, 1, 1], [], []>} : vector<32x128xf32>, vector<128x384xf32>, vector<32x384xf32> -> vector<32x384xf32>
    %25 = vector.extract_strided_slice %24 {offsets = [0, 0], sizes = [32, 128], strides = [1, 1]} : vector<32x384xf32> to vector<32x128xf32>
    %26 = vector.extract_strided_slice %24 {offsets = [0, 128], sizes = [32, 128], strides = [1, 1]} : vector<32x384xf32> to vector<32x128xf32>
    %27 = vector.extract_strided_slice %24 {offsets = [0, 256], sizes = [32, 128], strides = [1, 1]} : vector<32x384xf32> to vector<32x128xf32>
    %c1_i32_9 = arith.constant 1 : i32
    %28 = vector.broadcast %c1_i32_9 : i32 to vector<32x128xi32>
    %29 = arith.cmpi sge, %19, %28 : vector<32x128xi32>
    %c1_i32_10 = arith.constant 1 : i32
    %30 = tpu.dynamic_rotate %25 by %c1_i32_10 dim 0 : vector<32x128xf32>, i32 -> vector<32x128xf32>
    %cst_11 = arith.constant 0.000000e+00 : f32
    %31 = vector.broadcast %cst_11 : f32 to vector<32x128xf32>
    %32 = arith.select %29, %30, %31 : vector<32x128xi1>, vector<32x128xf32>
    %c14_i32 = arith.constant 14 : i32
    %33 = vector.broadcast %c14_i32 : i32 to vector<32x128xi32>
    %34 = arith.cmpi sle, %19, %33 : vector<32x128xi32>
    %c31_i32 = arith.constant 31 : i32
    %35 = tpu.dynamic_rotate %27 by %c31_i32 dim 0 : vector<32x128xf32>, i32 -> vector<32x128xf32>
    %cst_12 = arith.constant 0.000000e+00 : f32
    %36 = vector.broadcast %cst_12 : f32 to vector<32x128xf32>
    %37 = arith.select %34, %35, %36 : vector<32x128xi1>, vector<32x128xf32>
    %38 = arith.addf %26, %32 : vector<32x128xf32>
    %39 = arith.addf %38, %37 : vector<32x128xf32>
    %40 = vector.broadcast %21 : vector<1x128xf32> to vector<32x128xf32>
    %41 = arith.addf %39, %40 : vector<32x128xf32>
    %cst_13 = arith.constant 0.000000e+00 : f32
    %42 = vector.broadcast %cst_13 : f32 to vector<32x128xf32>
    %43 = arith.maximumf %41, %42 : vector<32x128xf32>
    %c0_14 = arith.constant 0 : index
    %c0_15 = arith.constant 0 : index
    %44 = vector.load %arg3[%c0_14, %c0_15] : memref<128x384xf32, #tpu.memory_space<vmem>>, vector<128x384xf32>
    %cst_16 = arith.constant dense<0.000000e+00> : vector<32x384xf32>
    %45 = tpu.matmul %43, %44, %cst_16 {dimension_numbers = #tpu.dot_dimension_numbers<[1], [0], [0], [1], [0, 0, 1, 1], [], []>} : vector<32x128xf32>, vector<128x384xf32>, vector<32x384xf32> -> vector<32x384xf32>
    %46 = vector.extract_strided_slice %45 {offsets = [0, 0], sizes = [32, 128], strides = [1, 1]} : vector<32x384xf32> to vector<32x128xf32>
    %47 = vector.extract_strided_slice %45 {offsets = [0, 128], sizes = [32, 128], strides = [1, 1]} : vector<32x384xf32> to vector<32x128xf32>
    %48 = vector.extract_strided_slice %45 {offsets = [0, 256], sizes = [32, 128], strides = [1, 1]} : vector<32x384xf32> to vector<32x128xf32>
    %c1_i32_17 = arith.constant 1 : i32
    %49 = vector.broadcast %c1_i32_17 : i32 to vector<32x128xi32>
    %50 = arith.cmpi sge, %19, %49 : vector<32x128xi32>
    %c1_i32_18 = arith.constant 1 : i32
    %51 = tpu.dynamic_rotate %46 by %c1_i32_18 dim 0 : vector<32x128xf32>, i32 -> vector<32x128xf32>
    %cst_19 = arith.constant 0.000000e+00 : f32
    %52 = vector.broadcast %cst_19 : f32 to vector<32x128xf32>
    %53 = arith.select %50, %51, %52 : vector<32x128xi1>, vector<32x128xf32>
    %c14_i32_20 = arith.constant 14 : i32
    %54 = vector.broadcast %c14_i32_20 : i32 to vector<32x128xi32>
    %55 = arith.cmpi sle, %19, %54 : vector<32x128xi32>
    %c31_i32_21 = arith.constant 31 : i32
    %56 = tpu.dynamic_rotate %48 by %c31_i32_21 dim 0 : vector<32x128xf32>, i32 -> vector<32x128xf32>
    %cst_22 = arith.constant 0.000000e+00 : f32
    %57 = vector.broadcast %cst_22 : f32 to vector<32x128xf32>
    %58 = arith.select %55, %56, %57 : vector<32x128xi1>, vector<32x128xf32>
    %59 = arith.addf %47, %53 : vector<32x128xf32>
    %60 = arith.addf %59, %58 : vector<32x128xf32>
    %61 = vector.broadcast %22 : vector<1x128xf32> to vector<32x128xf32>
    %62 = arith.addf %60, %61 : vector<32x128xf32>
    %63 = arith.addf %62, %2 : vector<32x128xf32>
    %c0_23 = arith.constant 0 : index
    %c0_24 = arith.constant 0 : index
    %64 = vector.load %arg5[%c0_23, %c0_24] : memref<32x128xf32, #tpu.memory_space<vmem>>, vector<32x128xf32>
    tpu.vector_store %arg5[%c0_23, %c0_24], %63 {strides = array<i32>} : memref<32x128xf32, #tpu.memory_space<vmem>>, vector<32x128xf32>,
    return
  }
  func.func @transform_0(%arg0: i32) -> (i32, i32) {
    %c0_i32 = arith.constant 0 : i32
    %c0_i32_0 = arith.constant 0 : i32
    return %arg0, %c0_i32 : i32, i32
  }
  func.func @transform_1(%arg0: i32) -> (i32, i32) {
    %c0_i32 = arith.constant 0 : i32
    %c0_i32_0 = arith.constant 0 : i32
    %c0_i32_1 = arith.constant 0 : i32
    return %c0_i32, %c0_i32_0 : i32, i32
  }
  func.func @transform_2(%arg0: i32) -> (i32, i32) {
    %c0_i32 = arith.constant 0 : i32
    %c0_i32_0 = arith.constant 0 : i32
    %c0_i32_1 = arith.constant 0 : i32
    return %c0_i32, %c0_i32_0 : i32, i32
  }
  func.func @transform_3(%arg0: i32) -> (i32, i32) {
    %c0_i32 = arith.constant 0 : i32
    %c0_i32_0 = arith.constant 0 : i32
    %c0_i32_1 = arith.constant 0 : i32
    return %c0_i32, %c0_i32_0 : i32, i32
  }
  func.func @transform_4(%arg0: i32) -> (i32, i32) {
    %c0_i32 = arith.constant 0 : i32
    %c0_i32_0 = arith.constant 0 : i32
    return %arg0, %c0_i32 : i32, i32
  }
}

</mosaic_0001>

<llo_original>
// kernel: tpu_custom_call.1
$region0: #{tpu_custom_call.1}
  #allocation0 [shape = 'u32[]', space=smem, size = 0x4, offset = 0x4, fixed_abs, tag = 'smem constant byte address 0x4 - core index']
  #allocation1 [shape = 'u32[72,128]{1,0:T(1,128)}', space=vmem, size = 0x9000, scoped, tag = 'internal scratch']
  %s0 = inlined_call_operand.hbm [shape: f32[32,128], index: 0, kind: input, shape index: {}]
  %s1 = inlined_call_operand.hbm [shape: f32[128,384], index: 1, kind: input, shape index: {}]
  %s2 = inlined_call_operand.hbm [shape: f32[128,384], index: 2, kind: input, shape index: {}]
  %s3 = inlined_call_operand.vmem [shape: f32[2,128], index: 3, kind: input, shape index: {}]
  %s4 = inlined_call_operand.hbm [shape: f32[32,128], index: 4, kind: output, shape index: {}]
  %s5 = sld [smem:[#allocation0]]
  $region38: #{tpu_custom_call.1} parent=0
    _
  %s7 = ssub.s32 1, %s5
  %s8 = scalar_select 0, %s7, %s5
  $region1: #{tpu_custom_call.1} parent=0
    #allocation2 [shape = 'u8[16384]{0}', space=vmem, size = 0x4000, scoped, tag = 'input window, operand 0, single buffered']
    #allocation3 [shape = 's32[1]{0}', space=sflag, size = 0x4, scoped, tag = 'scoped memory for tpu_custom_call.1']
    #allocation4 [shape = 's32[1]{0}', space=sflag, size = 0x4, scoped, tag = 'scoped memory for tpu_custom_call.1']
    #allocation5 [shape = 'u8[196608]{0}', space=vmem, size = 0x30000, scoped, tag = 'input window, operand 1, single buffered']
    #allocation6 [shape = 's32[1]{0}', space=sflag, size = 0x4, scoped, tag = 'scoped memory for tpu_custom_call.1']
    #allocation7 [shape = 'u8[196608]{0}', space=vmem, size = 0x30000, scoped, tag = 'input window, operand 2, single buffered']
    #allocation8 [shape = 'u8[16384]{0}', space=vmem, size = 0x4000, scoped, tag = 'output window, operand 0, single buffered']
    %9 = vsyncpa [#allocation3], 0
    %10 = vsyncpa [#allocation6], 0
    %11 = vsyncpa [#allocation4], 0
    // Predicated region
    $region2: #{tpu_custom_call.1} parent=1 // pred_check
      _
    $region3: #{tpu_custom_call.1} parent=1 // pred_check_branch
      %13 = sbr.rel (0) target = $region5
    $region4: #{tpu_custom_call.1} parent=1 // pred_region
      %15 = vsyncadd [#allocation3], 0
      %s16 = sshll.u32 %s0, 4
      %s17 = int_to_ptr.hbm [resolvable:$true] %s16
      %s18 = sshll.u32 [#allocation2], 4
      %s19 = int_to_ptr.vmem [resolvable:$true] %s18
      %24 = dma.hbm_to_vmem [thread:$0]  %s17, 512, %s19, [#allocation3], 128, 128, 8
    $region5: #{tpu_custom_call.1} parent=1 // pred_fallthru
      _
    // Predicated region
    $region6: #{tpu_custom_call.1} parent=1 // pred_check
      _
    $region7: #{tpu_custom_call.1} parent=1 // pred_check_branch
      %26 = sbr.rel (0) target = $region9
    $region8: #{tpu_custom_call.1} parent=1 // pred_region
      %28 = vsyncadd [#allocation6], 0
      %s29 = sshll.u32 %s1, 4
      %s30 = int_to_ptr.hbm [resolvable:$true] %s29
      %s31 = sshll.u32 [#allocation5], 4
      %s32 = int_to_ptr.vmem [resolvable:$true] %s31
      %37 = dma.hbm_to_vmem [thread:$0]  %s30, 6144, %s32, [#allocation6], 384, 384, 24
    $region9: #{tpu_custom_call.1} parent=1 // pred_fallthru
      _
    // Predicated region
    $region10: #{tpu_custom_call.1} parent=1 // pred_check
      _
    $region11: #{tpu_custom_call.1} parent=1 // pred_check_branch
      %39 = sbr.rel (0) target = $region13
    $region12: #{tpu_custom_call.1} parent=1 // pred_region
      %41 = vsyncadd [#allocation6], 0
      %s42 = sshll.u32 %s2, 4
      %s43 = int_to_ptr.hbm [resolvable:$true] %s42
      %s44 = sshll.u32 [#allocation7], 4
      %s45 = int_to_ptr.vmem [resolvable:$true] %s44
      %50 = dma.hbm_to_vmem [thread:$0]  %s43, 6144, %s45, [#allocation6], 384, 384, 24
    $region13: #{tpu_custom_call.1} parent=1 // pred_fallthru
      _
    // Predicated region
    $region14: #{tpu_custom_call.1} parent=1 // pred_check
      _
    $region15: #{tpu_custom_call.1} parent=1 // pred_check_branch
      %52 = sbr.rel (0) target = $region17
    $region16: #{tpu_custom_call.1} parent=1 // pred_region
      _
    $region17: #{tpu_custom_call.1} parent=1 // pred_fallthru
      _
    // Predicated region
    $region18: #{tpu_custom_call.1} parent=1 // pred_check
      _
    $region19: #{tpu_custom_call.1} parent=1 // pred_check_branch
      %54 = sbr.rel (0) target = $region21
    $region20: #{tpu_custom_call.1} parent=1 // pred_region
      %56 = dma.done [#allocation3], 512
    $region21: #{tpu_custom_call.1} parent=1 // pred_fallthru
      _
    // Predicated region
    $region22: #{tpu_custom_call.1} parent=1 // pred_check
      _
    $region23: #{tpu_custom_call.1} parent=1 // pred_check_branch
      %58 = sbr.rel (0) target = $region25
    $region24: #{tpu_custom_call.1} parent=1 // pred_region
      %60 = dma.done [#allocation6], 6144
    $region25: #{tpu_custom_call.1} parent=1 // pred_fallthru
      _
    // Predicated region
    $region26: #{tpu_custom_call.1} parent=1 // pred_check
      _
    $region27: #{tpu_custom_call.1} parent=1 // pred_check_branch
      %62 = sbr.rel (0) target = $region29
    $region28: #{tpu_custom_call.1} parent=1 // pred_region
      %64 = dma.done [#allocation6], 6144
    $region29: #{tpu_custom_call.1} parent=1 // pred_fallthru
      _
    %v65 = vld [vmem:[#allocation2] sm:$0xff]
    %v66 = vld [vmem:[#allocation2 + $0x8] sm:$0xff]
    %v67 = vld [vmem:[#allocation2 + $0x10] sm:$0xff]
    %v68 = vld [vmem:[#allocation2 + $0x18] sm:$0xff]
    %v69 = vmax.f32 %v65, 0.0
    %v70 = vmax.f32 %v66, 0.0
    %v71 = vmax.f32 %v67, 0.0
    %v72 = vmax.f32 %v68, 0.0
    %v73 = vlaneseq
    %v74 = vshrl.u32 %v73, 7
    %v75 = vadd.s32 %v74, 8
    %v76 = vadd.s32 %v74, 16
    %v77 = vadd.s32 %v74, 24
    %vm78 = vcmp.lt.s32.totalorder %v74, 0
    %v79 = vsub.s32 0, %v74
    %v80 = vsel %vm78, %v79, %v74
    %v81 = vshrl.u32 %v80, 4
    %v82 = vand.u32 %v80, 15
    %v83 = vsub.s32 0, %v82
    %v84 = vsel %vm78, %v83, %v82
    %vm85 = vcmp.lt.s32.totalorder %v75, 0
    %v86 = vsub.s32 0, %v75
    %v87 = vsel %vm85, %v86, %v75
    %v88 = vshrl.u32 %v87, 4
    %v89 = vand.u32 %v87, 15
    %v90 = vsub.s32 0, %v89
    %v91 = vsel %vm85, %v90, %v89
    %vm92 = vcmp.lt.s32.totalorder %v76, 0
    %v93 = vsub.s32 0, %v76
    %v94 = vsel %vm92, %v93, %v76
    %v95 = vshrl.u32 %v94, 4
    %v96 = vand.u32 %v94, 15
    %v97 = vsub.s32 0, %v96
    %v98 = vsel %vm92, %v97, %v96
    %vm99 = vcmp.lt.s32.totalorder %v77, 0
    %v100 = vsub.s32 0, %v77
    %v101 = vsel %vm99, %v100, %v77
    %v102 = vshrl.u32 %v101, 4
    %v103 = vand.u32 %v101, 15
    %v104 = vsub.s32 0, %v103
    %v105 = vsel %vm99, %v104, %v103
    %vm106 = vcmp.ne.s32.totalorder %v84, 0
    %vm107 = vcmp.ne.s32.totalorder %v91, 0
    %vm108 = vcmp.ne.s32.totalorder %v98, 0
    %vm109 = vcmp.ne.s32.totalorder %v105, 0
    %vm110 = vcmp.lt.s32.totalorder %v84, 0
    %vm111 = vcmp.lt.s32.totalorder %v91, 0
    %vm112 = vcmp.lt.s32.totalorder %v98, 0
    %vm113 = vcmp.lt.s32.totalorder %v105, 0
    %vm114 = vmand %vm110, %vm106
    %vm115 = vmand %vm111, %vm107
    %vm116 = vmand %vm112, %vm108
    %vm117 = vmand %vm113, %vm109
    %v118 = vadd.s32 %v84, 16
    %v119 = vadd.s32 %v91, 16
    %v120 = vadd.s32 %v98, 16
    %v121 = vadd.s32 %v105, 16
    %v122 = vsel %vm114, %v118, %v84
    %v123 = vsel %vm115, %v119, %v91
    %v124 = vsel %vm116, %v120, %v98
    %v125 = vsel %vm117, %v121, %v105
    %v126 = vld [vmem:[%s3] sm:$0x3]
    %v127 = vld [vmem:[#allocation5] sm:$0xff]
    %v128 = vld [vmem:[#allocation5 + $0x8] sm:$0xff]
    %v129 = vld [vmem:[#allocation5 + $0x10] sm:$0xff]
    %v130 = vld [vmem:[#allocation5 + $0x18] sm:$0xff]
    %v131 = vld [vmem:[#allocation5 + $0x20] sm:$0xff]
    %v132 = vld [vmem:[#allocation5 + $0x28] sm:$0xff]
    %v133 = vld [vmem:[#allocation5 + $0x30] sm:$0xff]
    %v134 = vld [vmem:[#allocation5 + $0x38] sm:$0xff]
    %v135 = vld [vmem:[#allocation5 + $0x40] sm:$0xff]
    %v136 = vld [vmem:[#allocation5 + $0x48] sm:$0xff]
    %v137 = vld [vmem:[#allocation5 + $0x50] sm:$0xff]
    %v138 = vld [vmem:[#allocation5 + $0x58] sm:$0xff]
    %v139 = vld [vmem:[#allocation5 + $0x60] sm:$0xff]
    %v140 = vld [vmem:[#allocation5 + $0x68] sm:$0xff]
    %v141 = vld [vmem:[#allocation5 + $0x70] sm:$0xff]
    %v142 = vld [vmem:[#allocation5 + $0x78] sm:$0xff]
    %v143 = vld [vmem:[#allocation5 + $0x80] sm:$0xff]
    %v144 = vld [vmem:[#allocation5 + $0x88] sm:$0xff]
    %v145 = vld [vmem:[#allocation5 + $0x90] sm:$0xff]
    %v146 = vld [vmem:[#allocation5 + $0x98] sm:$0xff]
    %v147 = vld [vmem:[#allocation5 + $0xa0] sm:$0xff]
    %v148 = vld [vmem:[#allocation5 + $0xa8] sm:$0xff]
    %v149 = vld [vmem:[#allocation5 + $0xb0] sm:$0xff]
    %v150 = vld [vmem:[#allocation5 + $0xb8] sm:$0xff]
    %v151 = vld [vmem:[#allocation5 + $0xc0] sm:$0xff]
    %v152 = vld [vmem:[#allocation5 + $0xc8] sm:$0xff]
    %v153 = vld [vmem:[#allocation5 + $0xd0] sm:$0xff]
    %v154 = vld [vmem:[#allocation5 + $0xd8] sm:$0xff]
    %v155 = vld [vmem:[#allocation5 + $0xe0] sm:$0xff]
    %v156 = vld [vmem:[#allocation5 + $0xe8] sm:$0xff]
    %v157 = vld [vmem:[#allocation5 + $0xf0] sm:$0xff]
    %v158 = vld [vmem:[#allocation5 + $0xf8] sm:$0xff]
    %v159 = vld [vmem:[#allocation5 + $0x100] sm:$0xff]
    %v160 = vld [vmem:[#allocation5 + $0x108] sm:$0xff]
    %v161 = vld [vmem:[#allocation5 + $0x110] sm:$0xff]
    %v162 = vld [vmem:[#allocation5 + $0x118] sm:$0xff]
    %v163 = vld [vmem:[#allocation5 + $0x120] sm:$0xff]
    %v164 = vld [vmem:[#allocation5 + $0x128] sm:$0xff]
    %v165 = vld [vmem:[#allocation5 + $0x130] sm:$0xff]
    %v166 = vld [vmem:[#allocation5 + $0x138] sm:$0xff]
    %v167 = vld [vmem:[#allocation5 + $0x140] sm:$0xff]
    %v168 = vld [vmem:[#allocation5 + $0x148] sm:$0xff]
    %v169 = vld [vmem:[#allocation5 + $0x150] sm:$0xff]
    %v170 = vld [vmem:[#allocation5 + $0x158] sm:$0xff]
    %v171 = vld [vmem:[#allocation5 + $0x160] sm:$0xff]
    %v172 = vld [vmem:[#allocation5 + $0x168] sm:$0xff]
    %v173 = vld [vmem:[#allocation5 + $0x170] sm:$0xff]
    %v174 = vld [vmem:[#allocation5 + $0x178] sm:$0xff]
    %175 = vmatpush.msra.mxu0 %v172
    %176 = vmatpush.msra.mxu0 %v169
    %177 = vmatpush.msra.mxu0 %v166
    %178 = vmatpush.msra.mxu0 %v163
    %179 = vmatpush.msra.mxu0 %v160
    %180 = vmatpush.msra.mxu0 %v157
    %181 = vmatpush.msra.mxu0 %v154
    %182 = vmatpush.msra.mxu0 %v151
    %183 = vmatpush.msra.mxu0 %v148
    %184 = vmatpush.msra.mxu0 %v145
    %185 = vmatpush.msra.mxu0 %v142
    %186 = vmatpush.msra.mxu0 %v139
    %187 = vmatpush.msra.mxu0 %v136
    %188 = vmatpush.msra.mxu0 %v133
    %189 = vmatpush.msra.mxu0 %v130
    %190 = vmatpush.msra.mxu0 %v127
    %191 = vmatmul.f32.gmra.mxu0 %v69
    %v192 = vpop.f32.mrf.mxu0
    %v193 = vadd.f32 0.0, %v192
    %194 = vmatmul.f32.gmra.mxu0 %v70
    %v195 = vpop.f32.mrf.mxu0
    %v196 = vadd.f32 0.0, %v195
    %197 = vmatmul.f32.gmra.mxu0 %v71
    %v198 = vpop.f32.mrf.mxu0
    %v199 = vadd.f32 0.0, %v198
    %200 = vmatmul.f32.gmra.mxu0 %v72
    %v201 = vpop.f32.mrf.mxu0
    %v202 = vadd.f32 0.0, %v201
    %203 = vdwg.mxu0
    %204 = vmatpush.msra.mxu0 %v173
    %205 = vmatpush.msra.mxu0 %v170
    %206 = vmatpush.msra.mxu0 %v167
    %207 = vmatpush.msra.mxu0 %v164
    %208 = vmatpush.msra.mxu0 %v161
    %209 = vmatpush.msra.mxu0 %v158
    %210 = vmatpush.msra.mxu0 %v155
    %211 = vmatpush.msra.mxu0 %v152
    %212 = vmatpush.msra.mxu0 %v149
    %213 = vmatpush.msra.mxu0 %v146
    %214 = vmatpush.msra.mxu0 %v143
    %215 = vmatpush.msra.mxu0 %v140
    %216 = vmatpush.msra.mxu0 %v137
    %217 = vmatpush.msra.mxu0 %v134
    %218 = vmatpush.msra.mxu0 %v131
    %219 = vmatpush.msra.mxu0 %v128
    %220 = vmatmul.f32.gmra.mxu0 %v69
    %v221 = vpop.f32.mrf.mxu0
    %v222 = vadd.f32 0.0, %v221
    %223 = vmatmul.f32.gmra.mxu0 %v70
    %v224 = vpop.f32.mrf.mxu0
    %v225 = vadd.f32 0.0, %v224
    %226 = vmatmul.f32.gmra.mxu0 %v71
    %v227 = vpop.f32.mrf.mxu0
    %v228 = vadd.f32 0.0, %v227
    %229 = vmatmul.f32.gmra.mxu0 %v72
    %v230 = vpop.f32.mrf.mxu0
    %v231 = vadd.f32 0.0, %v230
    %232 = vdwg.mxu0
    %233 = vmatpush.msra.mxu0 %v174
    %234 = vmatpush.msra.mxu0 %v171
    %235 = vmatpush.msra.mxu0 %v168
    %236 = vmatpush.msra.mxu0 %v165
    %237 = vmatpush.msra.mxu0 %v162
    %238 = vmatpush.msra.mxu0 %v159
    %239 = vmatpush.msra.mxu0 %v156
    %240 = vmatpush.msra.mxu0 %v153
    %241 = vmatpush.msra.mxu0 %v150
    %242 = vmatpush.msra.mxu0 %v147
    %243 = vmatpush.msra.mxu0 %v144
    %244 = vmatpush.msra.mxu0 %v141
    %245 = vmatpush.msra.mxu0 %v138
    %246 = vmatpush.msra.mxu0 %v135
    %247 = vmatpush.msra.mxu0 %v132
    %248 = vmatpush.msra.mxu0 %v129
    %249 = vmatmul.f32.gmra.mxu0 %v69
    %v250 = vpop.f32.mrf.mxu0
    %v251 = vadd.f32 0.0, %v250
    %252 = vmatmul.f32.gmra.mxu0 %v70
    %v253 = vpop.f32.mrf.mxu0
    %v254 = vadd.f32 0.0, %v253
    %255 = vmatmul.f32.gmra.mxu0 %v71
    %v256 = vpop.f32.mrf.mxu0
    %v257 = vadd.f32 0.0, %v256
    %258 = vmatmul.f32.gmra.mxu0 %v72
    %v259 = vpop.f32.mrf.mxu0
    %v260 = vadd.f32 0.0, %v259
    %261 = vdwg.mxu0
    %vm262 = vcmp.ge.s32.totalorder %v122, 1
    %vm263 = vcmp.ge.s32.totalorder %v123, 1
    %vm264 = vcmp.ge.s32.totalorder %v124, 1
    %vm265 = vcmp.ge.s32.totalorder %v125, 1
    %v266 = vrot.slane %v193, 7
    %v267 = vrot.slane %v196, 7
    %v268 = vrot.slane %v199, 7
    %v269 = vrot.slane %v202, 7
    %vm270 = vcmp.lt.s32.totalorder %v74, 1
    %v271 = vsel %vm270, %v268, %v269
    %v272 = vsel %vm270, %v267, %v268
    %v273 = vsel %vm270, %v266, %v267
    %v274 = vsel %vm270, %v269, %v266
    %v275 = vsel %vm262, %v274, 0.0
    %v276 = vsel %vm263, %v273, 0.0
    %v277 = vsel %vm264, %v272, 0.0
    %v278 = vsel %vm265, %v271, 0.0
    %vm279 = vcmp.le.s32.totalorder %v122, 14
    %vm280 = vcmp.le.s32.totalorder %v123, 14
    %vm281 = vcmp.le.s32.totalorder %v124, 14
    %vm282 = vcmp.le.s32.totalorder %v125, 14
    %v283 = vrot.slane %v251, 1
    %v284 = vrot.slane %v254, 1
    %v285 = vrot.slane %v257, 1
    %v286 = vrot.slane %v260, 1
    %vm287 = vcmp.lt.s32.totalorder %v74, 7
    %v288 = vsel %vm287, %v285, %v286
    %v289 = vsel %vm287, %v284, %v285
    %v290 = vsel %vm287, %v283, %v284
    %v291 = vsel %vm287, %v286, %v283
    %v292 = vsel %vm279, %v290, 0.0
    %v293 = vsel %vm280, %v289, 0.0
    %v294 = vsel %vm281, %v288, 0.0
    %v295 = vsel %vm282, %v291, 0.0
    %v296 = vadd.f32 %v222, %v275
    %v297 = vadd.f32 %v225, %v276
    %v298 = vadd.f32 %v228, %v277
    %v299 = vadd.f32 %v231, %v278
    %v300 = vadd.f32 %v296, %v292
    %v301 = vadd.f32 %v297, %v293
    %v302 = vadd.f32 %v298, %v294
    %v303 = vadd.f32 %v299, %v295
    %v304 = vperm.slane %v126, 0
    %v305 = vadd.f32 %v300, %v304
    %v306 = vadd.f32 %v301, %v304
    %v307 = vadd.f32 %v302, %v304
    %v308 = vadd.f32 %v303, %v304
    %v309 = vmax.f32 %v305, 0.0
    %v310 = vmax.f32 %v306, 0.0
    %v311 = vmax.f32 %v307, 0.0
    %v312 = vmax.f32 %v308, 0.0
    %v313 = vld [vmem:[#allocation7] sm:$0xff]
    %v314 = vld [vmem:[#allocation7 + $0x8] sm:$0xff]
    %v315 = vld [vmem:[#allocation7 + $0x10] sm:$0xff]
    %v316 = vld [vmem:[#allocation7 + $0x18] sm:$0xff]
    %v317 = vld [vmem:[#allocation7 + $0x20] sm:$0xff]
    %v318 = vld [vmem:[#allocation7 + $0x28] sm:$0xff]
    %v319 = vld [vmem:[#allocation7 + $0x30] sm:$0xff]
    %v320 = vld [vmem:[#allocation7 + $0x38] sm:$0xff]
    %v321 = vld [vmem:[#allocation7 + $0x40] sm:$0xff]
    %v322 = vld [vmem:[#allocation7 + $0x48] sm:$0xff]
    %v323 = vld [vmem:[#allocation7 + $0x50] sm:$0xff]
    %v324 = vld [vmem:[#allocation7 + $0x58] sm:$0xff]
    %v325 = vld [vmem:[#allocation7 + $0x60] sm:$0xff]
    %v326 = vld [vmem:[#allocation7 + $0x68] sm:$0xff]
    %v327 = vld [vmem:[#allocation7 + $0x70] sm:$0xff]
    %v328 = vld [vmem:[#allocation7 + $0x78] sm:$0xff]
    %v329 = vld [vmem:[#allocation7 + $0x80] sm:$0xff]
    %v330 = vld [vmem:[#allocation7 + $0x88] sm:$0xff]
    %v331 = vld [vmem:[#allocation7 + $0x90] sm:$0xff]
    %v332 = vld [vmem:[#allocation7 + $0x98] sm:$0xff]
    %v333 = vld [vmem:[#allocation7 + $0xa0] sm:$0xff]
    %v334 = vld [vmem:[#allocation7 + $0xa8] sm:$0xff]
    %v335 = vld [vmem:[#allocation7 + $0xb0] sm:$0xff]
    %v336 = vld [vmem:[#allocation7 + $0xb8] sm:$0xff]
    %v337 = vld [vmem:[#allocation7 + $0xc0] sm:$0xff]
    %v338 = vld [vmem:[#allocation7 + $0xc8] sm:$0xff]
    %v339 = vld [vmem:[#allocation7 + $0xd0] sm:$0xff]
    %v340 = vld [vmem:[#allocation7 + $0xd8] sm:$0xff]
    %v341 = vld [vmem:[#allocation7 + $0xe0] sm:$0xff]
    %v342 = vld [vmem:[#allocation7 + $0xe8] sm:$0xff]
    %v343 = vld [vmem:[#allocation7 + $0xf0] sm:$0xff]
    %v344 = vld [vmem:[#allocation7 + $0xf8] sm:$0xff]
    %v345 = vld [vmem:[#allocation7 + $0x100] sm:$0xff]
    %v346 = vld [vmem:[#allocation7 + $0x108] sm:$0xff]
    %v347 = vld [vmem:[#allocation7 + $0x110] sm:$0xff]
    %v348 = vld [vmem:[#allocation7 + $0x118] sm:$0xff]
    %v349 = vld [vmem:[#allocation7 + $0x120] sm:$0xff]
    %v350 = vld [vmem:[#allocation7 + $0x128] sm:$0xff]
    %v351 = vld [vmem:[#allocation7 + $0x130] sm:$0xff]
    %v352 = vld [vmem:[#allocation7 + $0x138] sm:$0xff]
    %v353 = vld [vmem:[#allocation7 + $0x140] sm:$0xff]
    %v354 = vld [vmem:[#allocation7 + $0x148] sm:$0xff]
    %v355 = vld [vmem:[#allocation7 + $0x150] sm:$0xff]
    %v356 = vld [vmem:[#allocation7 + $0x158] sm:$0xff]
    %v357 = vld [vmem:[#allocation7 + $0x160] sm:$0xff]
    %v358 = vld [vmem:[#allocation7 + $0x168] sm:$0xff]
    %v359 = vld [vmem:[#allocation7 + $0x170] sm:$0xff]
    %v360 = vld [vmem:[#allocation7 + $0x178] sm:$0xff]
    %361 = vmatpush.msra.mxu0 %v358
    %362 = vmatpush.msra.mxu0 %v355
    %363 = vmatpush.msra.mxu0 %v352
    %364 = vmatpush.msra.mxu0 %v349
    %365 = vmatpush.msra.mxu0 %v346
    %366 = vmatpush.msra.mxu0 %v343
    %367 = vmatpush.msra.mxu0 %v340
    %368 = vmatpush.msra.mxu0 %v337
    %369 = vmatpush.msra.mxu0 %v334
    %370 = vmatpush.msra.mxu0 %v331
    %371 = vmatpush.msra.mxu0 %v328
    %372 = vmatpush.msra.mxu0 %v325
    %373 = vmatpush.msra.mxu0 %v322
    %374 = vmatpush.msra.mxu0 %v319
    %375 = vmatpush.msra.mxu0 %v316
    %376 = vmatpush.msra.mxu0 %v313
    %377 = vmatmul.f32.gmra.mxu0 %v309
    %v378 = vpop.f32.mrf.mxu0
    %v379 = vadd.f32 0.0, %v378
    %380 = vmatmul.f32.gmra.mxu0 %v310
    %v381 = vpop.f32.mrf.mxu0
    %v382 = vadd.f32 0.0, %v381
    %383 = vmatmul.f32.gmra.mxu0 %v311
    %v384 = vpop.f32.mrf.mxu0
    %v385 = vadd.f32 0.0, %v384
    %386 = vmatmul.f32.gmra.mxu0 %v312
    %v387 = vpop.f32.mrf.mxu0
    %v388 = vadd.f32 0.0, %v387
    %389 = vdwg.mxu0
    %390 = vmatpush.msra.mxu0 %v359
    %391 = vmatpush.msra.mxu0 %v356
    %392 = vmatpush.msra.mxu0 %v353
    %393 = vmatpush.msra.mxu0 %v350
    %394 = vmatpush.msra.mxu0 %v347
    %395 = vmatpush.msra.mxu0 %v344
    %396 = vmatpush.msra.mxu0 %v341
    %397 = vmatpush.msra.mxu0 %v338
    %398 = vmatpush.msra.mxu0 %v335
    %399 = vmatpush.msra.mxu0 %v332
    %400 = vmatpush.msra.mxu0 %v329
    %401 = vmatpush.msra.mxu0 %v326
    %402 = vmatpush.msra.mxu0 %v323
    %403 = vmatpush.msra.mxu0 %v320
    %404 = vmatpush.msra.mxu0 %v317
    %405 = vmatpush.msra.mxu0 %v314
    %406 = vmatmul.f32.gmra.mxu0 %v309
    %v407 = vpop.f32.mrf.mxu0
    %v408 = vadd.f32 0.0, %v407
    %409 = vmatmul.f32.gmra.mxu0 %v310
    %v410 = vpop.f32.mrf.mxu0
    %v411 = vadd.f32 0.0, %v410
    %412 = vmatmul.f32.gmra.mxu0 %v311
    %v413 = vpop.f32.mrf.mxu0
    %v414 = vadd.f32 0.0, %v413
    %415 = vmatmul.f32.gmra.mxu0 %v312
    %v416 = vpop.f32.mrf.mxu0
    %v417 = vadd.f32 0.0, %v416
    %418 = vdwg.mxu0
    %419 = vmatpush.msra.mxu0 %v360
    %420 = vmatpush.msra.mxu0 %v357
    %421 = vmatpush.msra.mxu0 %v354
    %422 = vmatpush.msra.mxu0 %v351
    %423 = vmatpush.msra.mxu0 %v348
    %424 = vmatpush.msra.mxu0 %v345
    %425 = vmatpush.msra.mxu0 %v342
    %426 = vmatpush.msra.mxu0 %v339
    %427 = vmatpush.msra.mxu0 %v336
    %428 = vmatpush.msra.mxu0 %v333
    %429 = vmatpush.msra.mxu0 %v330
    %430 = vmatpush.msra.mxu0 %v327
    %431 = vmatpush.msra.mxu0 %v324
    %432 = vmatpush.msra.mxu0 %v321
    %433 = vmatpush.msra.mxu0 %v318
    %434 = vmatpush.msra.mxu0 %v315
    %435 = vmatmul.f32.gmra.mxu0 %v309
    %v436 = vpop.f32.mrf.mxu0
    %v437 = vadd.f32 0.0, %v436
    %438 = vmatmul.f32.gmra.mxu0 %v310
    %v439 = vpop.f32.mrf.mxu0
    %v440 = vadd.f32 0.0, %v439
    %441 = vmatmul.f32.gmra.mxu0 %v311
    %v442 = vpop.f32.mrf.mxu0
    %v443 = vadd.f32 0.0, %v442
    %444 = vmatmul.f32.gmra.mxu0 %v312
    %v445 = vpop.f32.mrf.mxu0
    %v446 = vadd.f32 0.0, %v445
    %447 = vdwg.mxu0
    %v448 = vrot.slane %v379, 7
    %v449 = vrot.slane %v382, 7
    %v450 = vrot.slane %v385, 7
    %v451 = vrot.slane %v388, 7
    %v452 = vsel %vm270, %v450, %v451
    %v453 = vsel %vm270, %v449, %v450
    %v454 = vsel %vm270, %v448, %v449
    %v455 = vsel %vm270, %v451, %v448
    %v456 = vsel %vm262, %v455, 0.0
    %v457 = vsel %vm263, %v454, 0.0
    %v458 = vsel %vm264, %v453, 0.0
    %v459 = vsel %vm265, %v452, 0.0
    %v460 = vrot.slane %v437, 1
    %v461 = vrot.slane %v440, 1
    %v462 = vrot.slane %v443, 1
    %v463 = vrot.slane %v446, 1
    %v464 = vsel %vm287, %v462, %v463
    %v465 = vsel %vm287, %v461, %v462
    %v466 = vsel %vm287, %v460, %v461
    %v467 = vsel %vm287, %v463, %v460
    %v468 = vsel %vm279, %v466, 0.0
    %v469 = vsel %vm280, %v465, 0.0
    %v470 = vsel %vm281, %v464, 0.0
    %v471 = vsel %vm282, %v467, 0.0
    %v472 = vadd.f32 %v408, %v456
    %v473 = vadd.f32 %v411, %v457
    %v474 = vadd.f32 %v414, %v458
    %v475 = vadd.f32 %v417, %v459
    %v476 = vadd.f32 %v472, %v468
    %v477 = vadd.f32 %v473, %v469
    %v478 = vadd.f32 %v474, %v470
    %v479 = vadd.f32 %v475, %v471
    %v480 = vperm.slane %v126, 1
    %v481 = vadd.f32 %v476, %v480
    %v482 = vadd.f32 %v477, %v480
    %v483 = vadd.f32 %v478, %v480
    %v484 = vadd.f32 %v479, %v480
    %v485 = vadd.f32 %v481, %v69
    %v486 = vadd.f32 %v482, %v70
    %v487 = vadd.f32 %v483, %v71
    %v488 = vadd.f32 %v484, %v72
    %489 = vst [vmem:[#allocation8] sm:$0xff] %v485
    %490 = vst [vmem:[#allocation8 + $0x8] sm:$0xff] %v486
    %491 = vst [vmem:[#allocation8 + $0x10] sm:$0xff] %v487
    %492 = vst [vmem:[#allocation8 + $0x18] sm:$0xff] %v488
    // Predicated region
    $region30: #{tpu_custom_call.1} parent=1 // pred_check
      _
    $region31: #{tpu_custom_call.1} parent=1 // pred_check_branch
      %494 = sbr.rel (0) target = $region33
    $region32: #{tpu_custom_call.1} parent=1 // pred_region
      %496 = vsyncadd [#allocation4], 0
      %s497 = sshll.u32 [#allocation8], 4
      %s498 = int_to_ptr.vmem [resolvable:$true] %s497
      %s499 = sshll.u32 %s4, 4
      %s500 = int_to_ptr.hbm [resolvable:$true] %s499
      %505 = dma.vmem_to_hbm [thread:$0]  %s498, 512, %s500, [#allocation4], 128, 128, 8
    $region33: #{tpu_custom_call.1} parent=1 // pred_fallthru
      _
    // Predicated region
    $region34: #{tpu_custom_call.1} parent=1 // pred_check
      _
    $region35: #{tpu_custom_call.1} parent=1 // pred_check_branch
      %507 = sbr.rel (0) target = $region37
    $region36: #{tpu_custom_call.1} parent=1 // pred_region
      %509 = dma.done [#allocation4], 512
    $region37: #{tpu_custom_call.1} parent=1 // pred_fallthru
      _
    %510 = vsyncpa [#allocation3], 1
    %511 = vsyncpa [#allocation6], 1
    %512 = vsyncpa [#allocation4], 1

</llo_original>
